<compile_context>
chip_gen: v7x
topology: tpu7x:2x2x1
jax: 0.10.0
libtpu: 0.0.40
codegen_flags: <defaults>
</compile_context>

<pallas_src>
import functools

import jax
import jax.numpy as jnp
import numpy as np
from jax.experimental import pallas as pl
from jax.experimental.pallas import tpu as pltpu

TILE_B = 128  # batch rows per grid step (lane-dense, multiple of 128)


def _ppo_loss_kernel(values_ref, tgt_ref, actions_ref, cur_lp_ref, old_lp_ref,
                     out_ref, sq_acc, min_acc, ent_acc, *,
                     clip_param, vw, aw, ew, batch, tile_b):
    i = pl.program_id(0)

    @pl.when(i == 0)
    def _init():
        sq_acc[...] = jnp.zeros_like(sq_acc)
        min_acc[...] = jnp.zeros_like(min_acc)
        ent_acc[...] = jnp.zeros_like(ent_acc)

    values = values_ref[...]            # (1, TILE_B) f32
    tgt = tgt_ref[...]                  # (1, TILE_B) f32
    actions = actions_ref[...]          # (1, TILE_B) int32
    cur_lp = cur_lp_ref[...]            # (A, TILE_B) f32
    old_lp = old_lp_ref[...]            # (A, TILE_B) f32
    A = cur_lp.shape[0]

    # Mask for the padded tail of the last tile (global row index >= batch).
    lane = jax.lax.broadcasted_iota(jnp.int32, (1, tile_b), 1)
    valid = (i * tile_b + lane) < batch                       # (1, TILE_B) bool
    validf = valid.astype(jnp.float32)

    # value loss partials: sum of squared advantages over valid rows.
    adv = jnp.where(valid, tgt - values, 0.0)
    sq_acc[...] += adv * adv

    # gather(1, actions) fused into a single masked diff + sublane reduction.
    row = jax.lax.broadcasted_iota(jnp.int32, (A, tile_b), 0)
    onehot = row == actions                                   # (A, TILE_B)
    diff = jnp.where(onehot, cur_lp - old_lp, 0.0)
    gathered = jnp.sum(diff, axis=0, keepdims=True)           # (1, TILE_B)

    ratio = jnp.exp(gathered)
    clamped = jnp.clip(ratio, 1.0 - clip_param, 1.0 + clip_param)
    min_term = jnp.minimum(ratio * adv, clamped * adv)        # adv==0 on pad rows
    min_acc[...] += jnp.where(valid, min_term, 0.0)

    # Categorical(logits=cur_lp).entropy() with a single exp pass.
    mx = jnp.max(cur_lp, axis=0, keepdims=True)               # (1, TILE_B)
    shifted = cur_lp - mx
    e = jnp.exp(shifted)                                      # one EUP pass over (A, TILE_B)
    s = jnp.sum(e, axis=0, keepdims=True)                     # (1, TILE_B)
    ent = jnp.log(s) - jnp.sum(e * shifted, axis=0, keepdims=True) / s
    ent_acc[...] += ent * validf

    @pl.when(i == pl.num_programs(0) - 1)
    def _finalize():
        inv_b = 1.0 / batch
        value_loss = jnp.sum(sq_acc[...]) * inv_b
        action_loss = -jnp.sum(min_acc[...]) * inv_b
        entropy_loss = -jnp.sum(ent_acc[...]) * inv_b
        total = value_loss * vw + action_loss * aw + entropy_loss * ew
        out_ref[0] = value_loss
        out_ref[1] = action_loss
        out_ref[2] = entropy_loss
        out_ref[3] = total


@functools.partial(
    jax.jit,
    static_argnames=("clip_param", "value_loss_weight", "action_loss_weight",
                     "entropy_loss_weight"))
def ppo_loss(values, actions, cur_log_probs, old_log_probs, target_values,
             clip_param=0.1, value_loss_weight=1.0, action_loss_weight=1.0,
             entropy_loss_weight=0.01):
    B, A = cur_log_probs.shape
    G = -(-B // TILE_B)
    B_pad = G * TILE_B
    pad = B_pad - B

    # Lane-dense plumbing: batch on the lane axis, action dim on sublanes.
    cur_t = jnp.pad(cur_log_probs.astype(jnp.float32).T, ((0, 0), (0, pad)))
    old_t = jnp.pad(old_log_probs.astype(jnp.float32).T, ((0, 0), (0, pad)))
    vals = jnp.pad(values.astype(jnp.float32).reshape(1, B), ((0, 0), (0, pad)))
    tgts = jnp.pad(target_values.astype(jnp.float32).reshape(1, B),
                   ((0, 0), (0, pad)))
    acts = jnp.pad(actions.astype(jnp.int32).reshape(1, B), ((0, 0), (0, pad)))

    kernel = functools.partial(
        _ppo_loss_kernel,
        clip_param=float(clip_param),
        vw=float(value_loss_weight),
        aw=float(action_loss_weight),
        ew=float(entropy_loss_weight),
        batch=B,
        tile_b=TILE_B,
    )

    out = pl.pallas_call(
        kernel,
        out_shape=jax.ShapeDtypeStruct((4,), jnp.float32),
        grid_spec=pltpu.PrefetchScalarGridSpec(
            num_scalar_prefetch=0,
            grid=(G,),
            in_specs=[
                pl.BlockSpec((1, TILE_B), lambda i: (0, i)),   # values
                pl.BlockSpec((1, TILE_B), lambda i: (0, i)),   # target values
                pl.BlockSpec((1, TILE_B), lambda i: (0, i)),   # actions
                pl.BlockSpec((A, TILE_B), lambda i: (0, i)),   # cur log-probs (A, B)
                pl.BlockSpec((A, TILE_B), lambda i: (0, i)),   # old log-probs (A, B)
            ],
            out_specs=pl.BlockSpec((4,), lambda i: (0,),
                                   memory_space=pltpu.MemorySpace.SMEM),
            scratch_shapes=[pltpu.VMEM((1, TILE_B), jnp.float32)] * 3,
        ),
        compiler_params=pltpu.CompilerParams(
            dimension_semantics=("arbitrary",),   # reduction axis: resident accumulators
            vmem_limit_bytes=32 * 1024 * 1024,    # tiny tiles; safe on v5e/v6e/v7x
        ),
        cost_estimate=pl.CostEstimate(
            flops=12 * B_pad * A,
            transcendentals=B_pad * (A + 2),
            bytes_accessed=2 * B_pad * A * 4 + 3 * B_pad * 4 + 16,
        ),
    )(vals, tgts, acts, cur_t, old_t)

    value_loss, action_loss, entropy_loss, total_loss = out[0], out[1], out[2], out[3]
    # Mirror the PyTorch return structure but keep everything on-device
    # (no blocking .item()/float() host syncs).
    return total_loss, (value_loss, action_loss, entropy_loss, total_loss)


def _reference(values, actions, cur_lp, old_lp, tgt,
               clip_param=0.1, vw=1.0, aw=1.0, ew=0.01):
    adv = tgt - values
    value_loss = jnp.mean(adv ** 2)
    cur_a = jnp.take_along_axis(cur_lp, actions, axis=1)
    old_a = jnp.take_along_axis(old_lp, actions, axis=1)
    ratio = jnp.exp(cur_a - old_a)
    clamped = jnp.clip(ratio, 1 - clip_param, 1 + clip_param)
    action_loss = -jnp.mean(jnp.minimum(ratio * adv, clamped * adv))
    logp = jax.nn.log_softmax(cur_lp, axis=1)
    entropy = -jnp.sum(jnp.exp(logp) * logp, axis=1)
    entropy_loss = -jnp.mean(entropy)
    total = value_loss * vw + action_loss * aw + entropy_loss * ew
    return total, (value_loss, action_loss, entropy_loss, total)


def _run_case(B, A, seed):
    key = jax.random.PRNGKey(seed)
    k1, k2, k3, k4, k5 = jax.random.split(key, 5)
    values = jax.random.normal(k1, (B, 1), dtype=jnp.float32)
    target_values = jax.random.normal(k2, (B, 1), dtype=jnp.float32)
    cur_log_probs = jax.nn.log_softmax(
        jax.random.normal(k3, (B, A), dtype=jnp.float32), axis=1)
    old_log_probs = jax.nn.log_softmax(
        jax.random.normal(k4, (B, A), dtype=jnp.float32), axis=1)
    actions = jax.random.randint(k5, (B, 1), 0, A, dtype=jnp.int32)

    total_loss, stats = ppo_loss(values, actions, cur_log_probs,
                                 old_log_probs, target_values)
    jax.block_until_ready(total_loss)

    ref_total, ref_stats = _reference(values, actions, cur_log_probs,
                                      old_log_probs, target_values)
    np.testing.assert_allclose(np.asarray(total_loss), np.asarray(ref_total),
                               rtol=2e-5, atol=2e-5)
    np.testing.assert_allclose(np.asarray([np.asarray(x) for x in stats]),
                               np.asarray([np.asarray(x) for x in ref_stats]),
                               rtol=2e-5, atol=2e-5)


if __name__ == "__main__":
    # Small case (single tile, padded batch) and a multi-tile case with a
    # ragged last tile (exercises grid iteration, accumulators and masking).
    _run_case(B=8, A=16, seed=0)
    _run_case(B=200, A=16, seed=0)
    print("KERNEL_OK")
</pallas_src>

<mosaic_0001>
module attributes {stable_mosaic.version = 11 : i64} {
  func.func @_ppo_loss_kernel(%arg0: i32, %arg1: memref<1x128xf32, #tpu.memory_space<vmem>>, %arg2: memref<1x128xf32, #tpu.memory_space<vmem>>, %arg3: memref<1x128xi32, #tpu.memory_space<vmem>>, %arg4: memref<16x128xf32, #tpu.memory_space<vmem>>, %arg5: memref<16x128xf32, #tpu.memory_space<vmem>>, %arg6: memref<4xf32, #tpu.memory_space<smem>>, %arg7: memref<1x128xf32, #tpu.memory_space<vmem>>, %arg8: memref<1x128xf32, #tpu.memory_space<vmem>>, %arg9: memref<1x128xf32, #tpu.memory_space<vmem>>) attributes {dimension_semantics = [#tpu.dimension_semantics<arbitrary>], iteration_bounds = array<i64: 1>, scalar_prefetch = 0 : i64, scratch_operands = 3 : i64, tpu.core_type = #tpu.core_type<tc>, window_params = [{transform_indices = @transform_0, window_bounds = array<i64: 1, 128>}, {transform_indices = @transform_1, window_bounds = array<i64: 1, 128>}, {transform_indices = @transform_2, window_bounds = array<i64: 1, 128>}, {transform_indices = @transform_3, window_bounds = array<i64: 16, 128>}, {transform_indices = @transform_4, window_bounds = array<i64: 16, 128>}, {transform_indices = @transform_5, window_bounds = array<i64: 4>}]} {
    %c0_i32 = arith.constant 0 : i32
    %0 = arith.cmpi eq, %arg0, %c0_i32 : i32
    %1 = arith.extui %0 : i1 to i32
    %c0_i32_0 = arith.constant 0 : i32
    %2 = arith.cmpi ne, %1, %c0_i32_0 : i32
    scf.if %2 {
      %cst_32 = arith.constant 0.000000e+00 : f32
      %64 = vector.broadcast %cst_32 : f32 to vector<1x128xf32>
      %c0_33 = arith.constant 0 : index
      %c0_34 = arith.constant 0 : index
      %65 = vector.load %arg7[%c0_33, %c0_34] : memref<1x128xf32, #tpu.memory_space<vmem>>, vector<1x128xf32>
      tpu.vector_store %arg7[%c0_33, %c0_34], %64 {strides = array<i32>} : memref<1x128xf32, #tpu.memory_space<vmem>>, vector<1x128xf32>,
      %cst_35 = arith.constant 0.000000e+00 : f32
      %66 = vector.broadcast %cst_35 : f32 to vector<1x128xf32>
      %c0_36 = arith.constant 0 : index
      %c0_37 = arith.constant 0 : index
      %67 = vector.load %arg8[%c0_36, %c0_37] : memref<1x128xf32, #tpu.memory_space<vmem>>, vector<1x128xf32>
      tpu.vector_store %arg8[%c0_36, %c0_37], %66 {strides = array<i32>} : memref<1x128xf32, #tpu.memory_space<vmem>>, vector<1x128xf32>,
      %cst_38 = arith.constant 0.000000e+00 : f32
      %68 = vector.broadcast %cst_38 : f32 to vector<1x128xf32>
      %c0_39 = arith.constant 0 : index
      %c0_40 = arith.constant 0 : index
      %69 = vector.load %arg9[%c0_39, %c0_40] : memref<1x128xf32, #tpu.memory_space<vmem>>, vector<1x128xf32>
      tpu.vector_store %arg9[%c0_39, %c0_40], %68 {strides = array<i32>} : memref<1x128xf32, #tpu.memory_space<vmem>>, vector<1x128xf32>,
    } else {
    }
    %c0 = arith.constant 0 : index
    %c0_1 = arith.constant 0 : index
    %3 = vector.load %arg1[%c0, %c0_1] : memref<1x128xf32, #tpu.memory_space<vmem>>, vector<1x128xf32>
    %c0_2 = arith.constant 0 : index
    %c0_3 = arith.constant 0 : index
    %4 = vector.load %arg2[%c0_2, %c0_3] : memref<1x128xf32, #tpu.memory_space<vmem>>, vector<1x128xf32>
    %c0_4 = arith.constant 0 : index
    %c0_5 = arith.constant 0 : index
    %5 = vector.load %arg3[%c0_4, %c0_5] : memref<1x128xi32, #tpu.memory_space<vmem>>, vector<1x128xi32>
    %c0_6 = arith.constant 0 : index
    %c0_7 = arith.constant 0 : index
    %6 = vector.load %arg4[%c0_6, %c0_7] : memref<16x128xf32, #tpu.memory_space<vmem>>, vector<16x128xf32>
    %c0_8 = arith.constant 0 : index
    %c0_9 = arith.constant 0 : index
    %7 = vector.load %arg5[%c0_8, %c0_9] : memref<16x128xf32, #tpu.memory_space<vmem>>, vector<16x128xf32>
    %8 = tpu.iota {dimensions = array<i32: 1>} : vector<1x128xi32>
    %c128_i32 = arith.constant 128 : i32
    %9 = arith.muli %arg0, %c128_i32 : i32
    %10 = vector.broadcast %9 : i32 to vector<1x128xi32>
    %11 = arith.addi %10, %8 : vector<1x128xi32>
    %c8_i32 = arith.constant 8 : i32
    %12 = vector.broadcast %c8_i32 : i32 to vector<1x128xi32>
    %13 = arith.cmpi slt, %11, %12 : vector<1x128xi32>
    %14 = arith.extui %13 : vector<1x128xi1> to vector<1x128xi32>
    %15 = arith.sitofp %14 : vector<1x128xi32> to vector<1x128xf32>
    %16 = arith.subf %4, %3 : vector<1x128xf32>
    %cst = arith.constant 0.000000e+00 : f32
    %17 = vector.broadcast %cst : f32 to vector<1x128xf32>
    %18 = arith.select %13, %16, %17 : vector<1x128xi1>, vector<1x128xf32>
    %c0_10 = arith.constant 0 : index
    %c0_11 = arith.constant 0 : index
    %19 = vector.load %arg7[%c0_10, %c0_11] : memref<1x128xf32, #tpu.memory_space<vmem>>, vector<1x128xf32>
    %20 = arith.mulf %18, %18 : vector<1x128xf32>
    %21 = arith.addf %19, %20 : vector<1x128xf32>
    %c0_12 = arith.constant 0 : index
    %c0_13 = arith.constant 0 : index
    %22 = vector.load %arg7[%c0_12, %c0_13] : memref<1x128xf32, #tpu.memory_space<vmem>>, vector<1x128xf32>
    tpu.vector_store %arg7[%c0_12, %c0_13], %21 {strides = array<i32>} : memref<1x128xf32, #tpu.memory_space<vmem>>, vector<1x128xf32>,
    %23 = tpu.iota {dimensions = array<i32: 0>} : vector<16x128xi32>
    %24 = vector.broadcast %5 : vector<1x128xi32> to vector<16x128xi32>
    %25 = arith.cmpi eq, %23, %24 : vector<16x128xi32>
    %26 = arith.subf %6, %7 : vector<16x128xf32>
    %cst_14 = arith.constant 0.000000e+00 : f32
    %27 = vector.broadcast %cst_14 : f32 to vector<16x128xf32>
    %28 = arith.select %25, %26, %27 : vector<16x128xi1>, vector<16x128xf32>
    %cst_15 = arith.constant dense<0.000000e+00> : vector<128xf32>
    %29 = vector.multi_reduction <add>, %28, %cst_15 [0] : vector<16x128xf32> to vector<128xf32>
    %30 = vector.shape_cast %29 : vector<128xf32> to vector<1x128xf32>
    %31 = math.exp %30 : vector<1x128xf32>
    %cst_16 = arith.constant 0.899999976 : f32
    %cst_17 = arith.constant 1.100000e+00 : f32
    %32 = vector.broadcast %cst_16 : f32 to vector<1x128xf32>
    %33 = arith.maximumf %32, %31 : vector<1x128xf32>
    %34 = vector.broadcast %cst_17 : f32 to vector<1x128xf32>
    %35 = arith.minimumf %34, %33 : vector<1x128xf32>
    %36 = arith.mulf %31, %18 : vector<1x128xf32>
    %37 = arith.mulf %35, %18 : vector<1x128xf32>
    %38 = arith.minimumf %36, %37 : vector<1x128xf32>
    %c0_18 = arith.constant 0 : index
    %c0_19 = arith.constant 0 : index
    %39 = vector.load %arg8[%c0_18, %c0_19] : memref<1x128xf32, #tpu.memory_space<vmem>>, vector<1x128xf32>
    %cst_20 = arith.constant 0.000000e+00 : f32
    %40 = vector.broadcast %cst_20 : f32 to vector<1x128xf32>
    %41 = arith.select %13, %38, %40 : vector<1x128xi1>, vector<1x128xf32>
    %42 = arith.addf %39, %41 : vector<1x128xf32>
    %c0_21 = arith.constant 0 : index
    %c0_22 = arith.constant 0 : index
    %43 = vector.load %arg8[%c0_21, %c0_22] : memref<1x128xf32, #tpu.memory_space<vmem>>, vector<1x128xf32>
    tpu.vector_store %arg8[%c0_21, %c0_22], %42 {strides = array<i32>} : memref<1x128xf32, #tpu.memory_space<vmem>>, vector<1x128xf32>,
    %cst_23 = arith.constant dense<0xFF800000> : vector<128xf32>
    %44 = vector.multi_reduction <maximumf>, %6, %cst_23 [0] : vector<16x128xf32> to vector<128xf32>
    %45 = vector.shape_cast %44 : vector<128xf32> to vector<1x128xf32>
    %46 = vector.broadcast %45 : vector<1x128xf32> to vector<16x128xf32>
    %47 = arith.subf %6, %46 : vector<16x128xf32>
    %48 = math.exp %47 : vector<16x128xf32>
    %cst_24 = arith.constant dense<0.000000e+00> : vector<128xf32>
    %49 = vector.multi_reduction <add>, %48, %cst_24 [0] : vector<16x128xf32> to vector<128xf32>
    %50 = vector.shape_cast %49 : vector<128xf32> to vector<1x128xf32>
    %51 = math.log %50 : vector<1x128xf32>
    %52 = arith.mulf %48, %47 : vector<16x128xf32>
    %cst_25 = arith.constant dense<0.000000e+00> : vector<128xf32>
    %53 = vector.multi_reduction <add>, %52, %cst_25 [0] : vector<16x128xf32> to vector<128xf32>
    %54 = vector.shape_cast %53 : vector<128xf32> to vector<1x128xf32>
    %55 = arith.divf %54, %50 : vector<1x128xf32>
    %56 = arith.subf %51, %55 : vector<1x128xf32>
    %c0_26 = arith.constant 0 : index
    %c0_27 = arith.constant 0 : index
    %57 = vector.load %arg9[%c0_26, %c0_27] : memref<1x128xf32, #tpu.memory_space<vmem>>, vector<1x128xf32>
    %58 = arith.mulf %56, %15 : vector<1x128xf32>
    %59 = arith.addf %57, %58 : vector<1x128xf32>
    %c0_28 = arith.constant 0 : index
    %c0_29 = arith.constant 0 : index
    %60 = vector.load %arg9[%c0_28, %c0_29] : memref<1x128xf32, #tpu.memory_space<vmem>>, vector<1x128xf32>
    tpu.vector_store %arg9[%c0_28, %c0_29], %59 {strides = array<i32>} : memref<1x128xf32, #tpu.memory_space<vmem>>, vector<1x128xf32>,
    %c0_i32_30 = arith.constant 0 : i32
    %61 = arith.cmpi eq, %arg0, %c0_i32_30 : i32
    %62 = arith.extui %61 : i1 to i32
    %c0_i32_31 = arith.constant 0 : i32
    %63 = arith.cmpi ne, %62, %c0_i32_31 : i32
    scf.if %63 {
      %c0_32 = arith.constant 0 : index
      %c0_33 = arith.constant 0 : index
      %64 = vector.load %arg7[%c0_32, %c0_33] : memref<1x128xf32, #tpu.memory_space<vmem>>, vector<1x128xf32>
      %65 = vector.shape_cast %64 : vector<1x128xf32> to vector<1x1x128xf32>
      %cst_34 = arith.constant dense<0.000000e+00> : vector<1xf32>
      %66 = vector.multi_reduction <add>, %65, %cst_34 [1, 2] : vector<1x1x128xf32> to vector<1xf32>
      %67 = vector.shape_cast %66 : vector<1xf32> to vector<1x1x1xf32>
      %68 = vector.extract %67[0, 0, 0] : f32 from vector<1x1x1xf32>
      %cst_35 = arith.constant 1.250000e-01 : f32
      %69 = arith.mulf %68, %cst_35 : f32
      %c0_36 = arith.constant 0 : index
      %c0_37 = arith.constant 0 : index
      %70 = vector.load %arg8[%c0_36, %c0_37] : memref<1x128xf32, #tpu.memory_space<vmem>>, vector<1x128xf32>
      %71 = vector.shape_cast %70 : vector<1x128xf32> to vector<1x1x128xf32>
      %cst_38 = arith.constant dense<0.000000e+00> : vector<1xf32>
      %72 = vector.multi_reduction <add>, %71, %cst_38 [1, 2] : vector<1x1x128xf32> to vector<1xf32>
      %73 = vector.shape_cast %72 : vector<1xf32> to vector<1x1x1xf32>
      %74 = vector.extract %73[0, 0, 0] : f32 from vector<1x1x1xf32>
      %cst_39 = arith.constant 0.000000e+00 : f32
      %75 = arith.subf %cst_39, %74 : f32
      %cst_40 = arith.constant 1.250000e-01 : f32
      %76 = arith.mulf %75, %cst_40 : f32
      %c0_41 = arith.constant 0 : index
      %c0_42 = arith.constant 0 : index
      %77 = vector.load %arg9[%c0_41, %c0_42] : memref<1x128xf32, #tpu.memory_space<vmem>>, vector<1x128xf32>
      %78 = vector.shape_cast %77 : vector<1x128xf32> to vector<1x1x128xf32>
      %cst_43 = arith.constant dense<0.000000e+00> : vector<1xf32>
      %79 = vector.multi_reduction <add>, %78, %cst_43 [1, 2] : vector<1x1x128xf32> to vector<1xf32>
      %80 = vector.shape_cast %79 : vector<1xf32> to vector<1x1x1xf32>
      %81 = vector.extract %80[0, 0, 0] : f32 from vector<1x1x1xf32>
      %cst_44 = arith.constant 0.000000e+00 : f32
      %82 = arith.subf %cst_44, %81 : f32
      %cst_45 = arith.constant 1.250000e-01 : f32
      %83 = arith.mulf %82, %cst_45 : f32
      %cst_46 = arith.constant 1.000000e+00 : f32
      %84 = arith.mulf %69, %cst_46 : f32
      %cst_47 = arith.constant 1.000000e+00 : f32
      %85 = arith.mulf %76, %cst_47 : f32
      %86 = arith.addf %84, %85 : f32
      %cst_48 = arith.constant 0.00999999977 : f32
      %87 = arith.mulf %83, %cst_48 : f32
      %88 = arith.addf %86, %87 : f32
      %c0_49 = arith.constant 0 : index
      %89 = memref.load %arg6[%c0_49] : memref<4xf32, #tpu.memory_space<smem>>
      memref.store %69, %arg6[%c0_49] : memref<4xf32, #tpu.memory_space<smem>>
      %c1 = arith.constant 1 : index
      %90 = memref.load %arg6[%c1] : memref<4xf32, #tpu.memory_space<smem>>
      memref.store %76, %arg6[%c1] : memref<4xf32, #tpu.memory_space<smem>>
      %c2 = arith.constant 2 : index
      %91 = memref.load %arg6[%c2] : memref<4xf32, #tpu.memory_space<smem>>
      memref.store %83, %arg6[%c2] : memref<4xf32, #tpu.memory_space<smem>>
      %c3 = arith.constant 3 : index
      %92 = memref.load %arg6[%c3] : memref<4xf32, #tpu.memory_space<smem>>
      memref.store %88, %arg6[%c3] : memref<4xf32, #tpu.memory_space<smem>>
    } else {
    }
    return
  }
  func.func @transform_0(%arg0: i32) -> (i32, i32) {
    %c0_i32 = arith.constant 0 : i32
    %c0_i32_0 = arith.constant 0 : i32
    return %c0_i32, %arg0 : i32, i32
  }
  func.func @transform_1(%arg0: i32) -> (i32, i32) {
    %c0_i32 = arith.constant 0 : i32
    %c0_i32_0 = arith.constant 0 : i32
    return %c0_i32, %arg0 : i32, i32
  }
  func.func @transform_2(%arg0: i32) -> (i32, i32) {
    %c0_i32 = arith.constant 0 : i32
    %c0_i32_0 = arith.constant 0 : i32
    return %c0_i32, %arg0 : i32, i32
  }
  func.func @transform_3(%arg0: i32) -> (i32, i32) {
    %c0_i32 = arith.constant 0 : i32
    %c0_i32_0 = arith.constant 0 : i32
    return %c0_i32, %arg0 : i32, i32
  }
  func.func @transform_4(%arg0: i32) -> (i32, i32) {
    %c0_i32 = arith.constant 0 : i32
    %c0_i32_0 = arith.constant 0 : i32
    return %c0_i32, %arg0 : i32, i32
  }
  func.func @transform_5(%arg0: i32) -> i32 {
    %c0_i32 = arith.constant 0 : i32
    %c0_i32_0 = arith.constant 0 : i32
    return %c0_i32 : i32
  }
}

</mosaic_0001>

<llo_original>
// kernel: ppo_loss.1
$region0: #{ppo_loss.1}
  #allocation0 [shape = 'u32[]', space=smem, size = 0x4, offset = 0x4, fixed_abs, tag = 'smem constant byte address 0x4 - core index']
  #allocation1 [shape = 'u32[144,128]{1,0:T(1,128)}', space=vmem, size = 0x12000, scoped, tag = 'internal scratch']
  #allocation2 [shape = 'f32[1,128]{1,0:T(1,128)}', space=vmem, size = 0x200, scoped, tag = 'scratch operand']
  #allocation3 [shape = 'f32[1,128]{1,0:T(1,128)}', space=vmem, size = 0x200, scoped, tag = 'scratch operand']
  #allocation4 [shape = 'f32[1,128]{1,0:T(1,128)}', space=vmem, size = 0x200, scoped, tag = 'scratch operand']
  %s0 = inlined_call_operand.vmem [shape: f32[1,128], index: 0, kind: input, shape index: {}]
  %s1 = inlined_call_operand.vmem [shape: f32[1,128], index: 1, kind: input, shape index: {}]
  %s2 = inlined_call_operand.vmem [shape: s32[1,128], index: 2, kind: input, shape index: {}]
  %s3 = inlined_call_operand.vmem [shape: f32[16,128], index: 3, kind: input, shape index: {}]
  %s4 = inlined_call_operand.vmem [shape: f32[16,128], index: 4, kind: input, shape index: {}]
  %s5 = inlined_call_operand.vmem [shape: f32[4], index: 5, kind: output, shape index: {}]
  %s6 = sld [smem:[#allocation0]]
  $region38: #{ppo_loss.1} parent=0
    _
  %s8 = ssub.s32 1, %s6
  %s9 = scalar_select 0, %s8, %s6
  $region1: #{ppo_loss.1} parent=0
    #allocation5 [shape = 'u8[512]{0}', space=smem, size = 0x200, scoped, tag = 'output window, operand 0, single buffered']
    #allocation6 [shape = 's32[1]{0}', space=sflag, size = 0x4, scoped, tag = 'scoped memory for ppo_loss.1']
    %10 = vsyncpa [#allocation6], 0
    // Predicated region
    $region2: #{ppo_loss.1} parent=1 // pred_check
      _
    $region3: #{ppo_loss.1} parent=1 // pred_check_branch
      %12 = sbr.rel (0) target = $region5
    $region4: #{ppo_loss.1} parent=1 // pred_region
      _
    $region5: #{ppo_loss.1} parent=1 // pred_fallthru
      _
    // Predicated region
    $region6: #{ppo_loss.1} parent=1 // pred_check
      _
    $region7: #{ppo_loss.1} parent=1 // pred_check_branch
      %14 = sbr.rel (0) target = $region9
    $region8: #{ppo_loss.1} parent=1 // pred_region
      _
    $region9: #{ppo_loss.1} parent=1 // pred_fallthru
      _
    // Predicated region
    $region10: #{ppo_loss.1} parent=1 // pred_check
      _
    $region11: #{ppo_loss.1} parent=1 // pred_check_branch
      %16 = sbr.rel (0) target = $region13
    $region12: #{ppo_loss.1} parent=1 // pred_region
      _
    $region13: #{ppo_loss.1} parent=1 // pred_fallthru
      _
    // Predicated region
    $region14: #{ppo_loss.1} parent=1 // pred_check
      _
    $region15: #{ppo_loss.1} parent=1 // pred_check_branch
      %18 = sbr.rel (0) target = $region17
    $region16: #{ppo_loss.1} parent=1 // pred_region
      _
    $region17: #{ppo_loss.1} parent=1 // pred_fallthru
      _
    // Predicated region
    $region18: #{ppo_loss.1} parent=1 // pred_check
      _
    $region19: #{ppo_loss.1} parent=1 // pred_check_branch
      %20 = sbr.rel (0) target = $region21
    $region20: #{ppo_loss.1} parent=1 // pred_region
      _
    $region21: #{ppo_loss.1} parent=1 // pred_fallthru
      _
    %p21 = scmp.eq.s32.totalorder 0, 0
    // Predicated region
    $region22: #{ppo_loss.1} parent=1 // pred_check
      %p22 = pneg %p21
    $region23: #{ppo_loss.1} parent=1 // pred_check_branch
      %24 = sbr.rel (%p22) target = $region25
    $region24: #{ppo_loss.1} parent=1 // pred_region
      %25 = vst [vmem:[#allocation2] sm:$0x1] 0.0
      %26 = vst [vmem:[#allocation3] sm:$0x1] 0.0
      %27 = vst [vmem:[#allocation4] sm:$0x1] 0.0
    $region25: #{ppo_loss.1} parent=1 // pred_fallthru
      _
    %v28 = vld [vmem:[%s0] sm:$0x1]
    %v29 = vld [vmem:[%s1] sm:$0x1]
    %v30 = vld [vmem:[%s2] sm:$0x1]
    %v31 = vld [vmem:[%s3] sm:$0xff]
    %v32 = vld [vmem:[%s3 + $0x8] sm:$0xff]
    %v33 = vld [vmem:[%s4] sm:$0xff]
    %v34 = vld [vmem:[%s4 + $0x8] sm:$0xff]
    %v35 = vlaneseq
    %v36 = vand.u32 %v35, 127
    %s37 = smul.u32 0, 128
    %v38 = vstv %s37
    %v39 = vadd.s32 %v38, %v36
    %vm40 = vcmp.lt.s32.totalorder %v39, 8
    %v41 = vsel %vm40, 1, 0
    %v42 = vcvt.s32.f32 %v41
    %v43 = vsub.f32 %v29, %v28
    %v44 = vsel %vm40, %v43, 0.0
    %v45 = vld [vmem:[#allocation2] sm:$0x1]
    %v46 = vmul.f32 %v44, %v44
    %v47 = vadd.f32 %v45, %v46
    %48 = vst [vmem:[#allocation2] sm:$0x1] %v47
    %v49 = vlaneseq
    %v50 = vshrl.u32 %v49, 7
    %v51 = vadd.s32 %v50, 8
    %v52 = vlaneseq
    %v53 = vshrl.u32 %v52, 7
    %v54 = vsub.s32 0, %v53
    %v55 = vrot.slane %v30, %v54
    %vm56 = vcmp.eq.s32.totalorder %v50, %v55
    %vm57 = vcmp.eq.s32.totalorder %v51, %v55
    %v58 = vsub.f32 %v31, %v33
    %v59 = vsub.f32 %v32, %v34
    %v60 = vsel %vm56, %v58, 0.0
    %v61 = vsel %vm57, %v59, 0.0
    %v62 = vadd.f32 %v60, %v61
    %v63 = vrot.slane %v62, 4
    %v64 = vadd.f32 %v62, %v63
    %v65 = vrot.slane %v64, 2
    %v66 = vadd.f32 %v64, %v65
    %v67 = vrot.slane %v66, 1
    %v68 = vadd.f32 %v66, %v67
    %v69 = vmul.f32 %v68, 1.442695
    %v70 = vpow.pop %v69
    %v71 = vmax.f32 %v70, 0.9
    %v72 = vmin.f32 %v71, 1.1
    %v73 = vmul.f32 %v70, %v44
    %v74 = vmul.f32 %v72, %v44
    %v75 = vmin.f32 %v73, %v74
    %v76 = vld [vmem:[#allocation3] sm:$0x1]
    %v77 = vsel %vm40, %v75, 0.0
    %v78 = vadd.f32 %v76, %v77
    %79 = vst [vmem:[#allocation3] sm:$0x1] %v78
    %v80 = vmax.f32 %v31, %v32
    %v81 = vrot.slane %v80, 4
    %v82 = vmax.f32 %v80, %v81
    %v83 = vrot.slane %v82, 2
    %v84 = vmax.f32 %v82, %v83
    %v85 = vrot.slane %v84, 1
    %v86 = vmax.f32 %v84, %v85
    %v87 = vsub.f32 %v31, %v86
    %v88 = vsub.f32 %v32, %v86
    %v89 = vmul.f32 %v87, 1.442695
    %v90 = vpow.pop %v89
    %v91 = vmul.f32 %v88, 1.442695
    %v92 = vpow.pop %v91
    %v93 = vadd.f32 %v90, %v92
    %v94 = vrot.slane %v93, 4
    %v95 = vadd.f32 %v93, %v94
    %v96 = vrot.slane %v95, 2
    %v97 = vadd.f32 %v95, %v96
    %v98 = vrot.slane %v97, 1
    %v99 = vadd.f32 %v97, %v98
    %v100 = vlog2.pop %v99
    %v101 = vmul.f32 %v100, 0.6931472
    %v102 = vmul.f32 %v90, %v87
    %v103 = vmul.f32 %v92, %v88
    %v104 = vadd.f32 %v102, %v103
    %v105 = vrot.slane %v104, 4
    %v106 = vadd.f32 %v104, %v105
    %v107 = vrot.slane %v106, 2
    %v108 = vadd.f32 %v106, %v107
    %v109 = vrot.slane %v108, 1
    %v110 = vadd.f32 %v108, %v109
    %v111 = vrcp.pop %v99
    %v112 = vmul.f32 %v110, %v111
    %v113 = vsub.f32 %v101, %v112
    %v114 = vld [vmem:[#allocation4] sm:$0x1]
    %v115 = vmul.f32 %v113, %v42
    %v116 = vadd.f32 %v114, %v115
    %117 = vst [vmem:[#allocation4] sm:$0x1] %v116
    // Predicated region
    $region26: #{ppo_loss.1} parent=1 // pred_check
      %p118 = pneg %p21
    $region27: #{ppo_loss.1} parent=1 // pred_check_branch
      %120 = sbr.rel (%p118) target = $region29
    $region28: #{ppo_loss.1} parent=1 // pred_region
      %v121 = vld [vmem:[#allocation2] sm:$0x1]
      %vm122 = vcmask 1040384
      %v123 = vsel %vm122, %v121, 0.0
      %124 = vadd.xlane.f32.xlu0 %v123
      %v125 = vpop.xlane.xlu0 %124
      %v126 = vrot.slane %v125, 4
      %v127 = vadd.f32 %v125, %v126
      %v128 = vrot.slane %v127, 2
      %v129 = vadd.f32 %v127, %v128
      %v130 = vrot.slane %v129, 1
      %v131 = vadd.f32 %v129, %v130
      %s132 = vtos %v131
      %s133 = smul.f32 %s132, 0.125
      %v134 = vld [vmem:[#allocation3] sm:$0x1]
      %v135 = vsel %vm122, %v134, 0.0
      %136 = vadd.xlane.f32.xlu0 %v135
      %v137 = vpop.xlane.xlu0 %136
      %v138 = vrot.slane %v137, 4
      %v139 = vadd.f32 %v137, %v138
      %v140 = vrot.slane %v139, 2
      %v141 = vadd.f32 %v139, %v140
      %v142 = vrot.slane %v141, 1
      %v143 = vadd.f32 %v141, %v142
      %s144 = vtos %v143
      %s145 = ssub.f32 0.0, %s144
      %s146 = smul.f32 %s145, 0.125
      %v147 = vld [vmem:[#allocation4] sm:$0x1]
      %v148 = vsel %vm122, %v147, 0.0
      %149 = vadd.xlane.f32.xlu0 %v148
      %v150 = vpop.xlane.xlu0 %149
      %v151 = vrot.slane %v150, 4
      %v152 = vadd.f32 %v150, %v151
      %v153 = vrot.slane %v152, 2
      %v154 = vadd.f32 %v152, %v153
      %v155 = vrot.slane %v154, 1
      %v156 = vadd.f32 %v154, %v155
      %s157 = vtos %v156
      %s158 = ssub.f32 0.0, %s157
      %s159 = smul.f32 %s158, 0.125
      %s160 = sadd.f32 %s133, %s146
      %s161 = smul.f32 %s159, 0.01
      %s162 = sadd.f32 %s160, %s161
      %s163 = scalar_lea.smem [#allocation5], 0
      %164 = sst [smem:[%s163]] %s133
      %s165 = scalar_lea.smem [#allocation5], 1
      %166 = sst [smem:[%s165]] %s146
      %s167 = scalar_lea.smem [#allocation5], 2
      %168 = sst [smem:[%s167]] %s159
      %s169 = scalar_lea.smem [#allocation5], 3
      %170 = sst [smem:[%s169]] %s162
    $region29: #{ppo_loss.1} parent=1 // pred_fallthru
      _
    // Predicated region
    $region30: #{ppo_loss.1} parent=1 // pred_check
      _
    $region31: #{ppo_loss.1} parent=1 // pred_check_branch
      %172 = sbr.rel (0) target = $region33
    $region32: #{ppo_loss.1} parent=1 // pred_region
      %s174 = ssub.s32 16, 16
      %175 = vsyncadd [#allocation6], %s174
      %s177 = sshll.u32 %s5, 4
      %s178 = int_to_ptr.vmem [resolvable:$true] %s177
      %180 = dma.smem_to_vmem [#allocation5], 16, %s178, [#allocation6]
    $region33: #{ppo_loss.1} parent=1 // pred_fallthru
      _
    // Predicated region
    $region34: #{ppo_loss.1} parent=1 // pred_check
      _
    $region35: #{ppo_loss.1} parent=1 // pred_check_branch
      %182 = sbr.rel (0) target = $region37
    $region36: #{ppo_loss.1} parent=1 // pred_region
      %183 = dma.done [#allocation6], 16
    $region37: #{ppo_loss.1} parent=1 // pred_fallthru
      _
    %184 = sfence
    %185 = vsyncpa [#allocation6], 1

</llo_original>
